<compile_context>
chip_gen: v7x
topology: tpu7x:2x2x1
jax: 0.10.0
libtpu: 0.0.40
codegen_flags: <defaults>
</compile_context>

<pallas_src>
import jax
import jax.numpy as jnp
from jax.experimental import pallas as pl
from jax.experimental.pallas import tpu as pltpu

BINS = 30
EMB = 100
T = 0.5
NEG_SLOPE = 0.01       # default negative_slope of nn.LeakyReLU
TM = 8192              # row tile; clamped for small inputs in the wrapper


def ad_layer_kernel(x_ref, vpos_ref, vneg_ref, w2_ref, o_ref):
    x = x_ref[...]                                             # (tm, 1)

    # layer1 (Linear(1,bins)+LeakyReLU), lin (+0.1*I residual) and *t are all
    # folded on the host into v_pos / v_neg; select the branch by sign(x).
    z = x * jnp.where(x >= 0, vpos_ref[...], vneg_ref[...])    # (tm, BINS)

    # layer2: Softmax(dim=-1) then Linear(bins, emb, bias=False)
    m = jnp.max(z, axis=-1, keepdims=True)
    e = jnp.exp(z - m)
    p = e * pl.reciprocal(jnp.sum(e, axis=-1, keepdims=True), approx=True)

    # Emit exactly EMB lanes so the wrapper never re-materializes the output.
    o_ref[...] = jnp.dot(p, w2_ref[...], preferred_element_type=jnp.float32)


def _round_up(a, b):
    return ((a + b - 1) // b) * b


def ad_layer_forward(x, w1_t, wlin_t, w2_t, *, tm=TM):
    """x: (..., 1) -> (..., EMB). Weights passed transposed (in_dim, out_dim)."""
    lead = x.shape[:-1]
    assert x.shape[-1] == 1
    n = 1
    for d in lead:
        n *= d

    # Host-side algebraic fold (valid because the input feature dim is 1, so
    # sign(x * w1_j) == sign(x) * sign(w1_j)):
    w1f = w1_t.astype(jnp.float32)                              # (1, BINS)
    wlin_eff = (wlin_t.astype(jnp.float32)
                + 0.1 * jnp.eye(BINS, dtype=jnp.float32)) * T   # residual + temp
    v_pos = jnp.where(w1f >= 0, w1f, NEG_SLOPE * w1f) @ wlin_eff  # x >= 0 branch
    v_neg = jnp.where(w1f <= 0, w1f, NEG_SLOPE * w1f) @ wlin_eff  # x <  0 branch
    w2f = w2_t.astype(jnp.float32)                              # (BINS, EMB)

    # Flatten rows; clamp the row tile for small inputs (second-minor dim only
    # needs to be a multiple of 8 for f32), then pad rows up to a tile multiple.
    x2 = x.reshape(n, 1).astype(jnp.float32)
    tm = max(8, min(tm, _round_up(n, 8)))
    n_pad = _round_up(n, tm)
    if n_pad != n:
        x2 = jnp.pad(x2, ((0, n_pad - n), (0, 0)))
    num_tiles = n_pad // tm

    out = pl.pallas_call(
        ad_layer_kernel,
        out_shape=jax.ShapeDtypeStruct((n_pad, EMB), jnp.float32),
        grid=(num_tiles,),
        in_specs=[
            pl.BlockSpec((tm, 1), lambda i: (i, 0)),        # x rows, tiled
            pl.BlockSpec((1, BINS), lambda i: (0, 0)),      # tiny folded weights:
            pl.BlockSpec((1, BINS), lambda i: (0, 0)),      #   VMEM-resident
            pl.BlockSpec((BINS, EMB), lambda i: (0, 0)),
        ],
        out_specs=pl.BlockSpec((tm, EMB), lambda i: (i, 0)),
        compiler_params=pltpu.CompilerParams(
            dimension_semantics=("parallel",),              # megacore shard on v7x
            vmem_limit_bytes=48 * 1024 * 1024),             # headroom for TM=8192
    )(x2, v_pos, v_neg, w2f)

    if n_pad != n:
        out = out[:n]
    return out.reshape(*lead, EMB)


def _reference(x, w1_t, wlin_t, w2_t):
    """Pure-JAX mirror of the PyTorch forward (unfolded), for a sanity check."""
    y = x @ w1_t
    y = jnp.where(y >= 0, y, NEG_SLOPE * y)
    y = y @ wlin_t + 0.1 * y
    y = y * T
    y = jax.nn.softmax(y, axis=-1)
    return y @ w2_t


if __name__ == "__main__":
    key = jax.random.PRNGKey(0)
    k_x, k_w1, k_wl, k_w2, k_x2 = jax.random.split(key, 5)

    # Deterministic synthetic parameters (shapes follow the nn.Module __init__).
    # PyTorch stores Linear weights as (out, in); we keep transposed (in, out).
    w1_t = (jax.random.uniform(k_w1, (1, BINS), jnp.float32) - 0.5) * 2.0
    wlin_t = (jax.random.uniform(k_wl, (BINS, BINS), jnp.float32) - 0.5) * (
        2.0 / jnp.sqrt(BINS))
    w2_t = (jax.random.uniform(k_w2, (BINS, EMB), jnp.float32) - 0.5) * (
        2.0 / jnp.sqrt(BINS))

    # Small input consistent with the module: (batch=2, seq=8, 1).
    x = jax.random.normal(k_x, (2, 8, 1), jnp.float32)
    out = jax.block_until_ready(ad_layer_forward(x, w1_t, wlin_t, w2_t))
    ref = _reference(x.astype(jnp.float32), w1_t, wlin_t, w2_t)
    assert out.shape == (2, 8, EMB)
    assert jnp.allclose(out, ref, atol=1e-3, rtol=1e-3), "mismatch vs reference"

    # Second small check exercising the multi-tile grid + ragged row padding.
    xb = jax.random.normal(k_x2, (2, 1000, 1), jnp.float32)
    outb = jax.block_until_ready(ad_layer_forward(xb, w1_t, wlin_t, w2_t, tm=512))
    refb = _reference(xb.astype(jnp.float32), w1_t, wlin_t, w2_t)
    assert outb.shape == (2, 1000, EMB)
    assert jnp.allclose(outb, refb, atol=1e-3, rtol=1e-3), "mismatch vs reference"

    print("KERNEL_OK")
</pallas_src>

<mosaic_0001>
module attributes {stable_mosaic.version = 11 : i64} {
  func.func @ad_layer_kernel(%arg0: i32, %arg1: memref<16x1xf32, #tpu.memory_space<vmem>>, %arg2: memref<1x30xf32, #tpu.memory_space<vmem>>, %arg3: memref<1x30xf32, #tpu.memory_space<vmem>>, %arg4: memref<30x100xf32, #tpu.memory_space<vmem>>, %arg5: memref<16x100xf32, #tpu.memory_space<vmem>>) attributes {dimension_semantics = [#tpu.dimension_semantics<parallel>], iteration_bounds = array<i64: 1>, scalar_prefetch = 0 : i64, scratch_operands = 0 : i64, tpu.core_type = #tpu.core_type<tc>, window_params = [{transform_indices = @transform_0, window_bounds = array<i64: 16, 1>}, {pipeline_mode = #tpu.pipeline_mode<synchronous>, transform_indices = @transform_1, window_bounds = array<i64: 1, 30>}, {pipeline_mode = #tpu.pipeline_mode<synchronous>, transform_indices = @transform_2, window_bounds = array<i64: 1, 30>}, {pipeline_mode = #tpu.pipeline_mode<synchronous>, transform_indices = @transform_3, window_bounds = array<i64: 30, 100>}, {transform_indices = @transform_4, window_bounds = array<i64: 16, 100>}]} {
    %c0 = arith.constant 0 : index
    %c0_0 = arith.constant 0 : index
    %0 = vector.load %arg1[%c0, %c0_0] : memref<16x1xf32, #tpu.memory_space<vmem>>, vector<16x1xf32>
    %cst = arith.constant 0.000000e+00 : f32
    %1 = vector.broadcast %cst : f32 to vector<16x1xf32>
    %2 = arith.cmpf oge, %0, %1 : vector<16x1xf32>
    %c0_1 = arith.constant 0 : index
    %c0_2 = arith.constant 0 : index
    %3 = vector.load %arg2[%c0_1, %c0_2] : memref<1x30xf32, #tpu.memory_space<vmem>>, vector<1x30xf32>
    %c0_3 = arith.constant 0 : index
    %c0_4 = arith.constant 0 : index
    %4 = vector.load %arg3[%c0_3, %c0_4] : memref<1x30xf32, #tpu.memory_space<vmem>>, vector<1x30xf32>
    %5 = vector.shape_cast %2 : vector<16x1xi1> to vector<16x1xi1>
    %6 = vector.broadcast %5 : vector<16x1xi1> to vector<16x30xi1>
    %7 = vector.shape_cast %3 : vector<1x30xf32> to vector<1x30xf32>
    %8 = vector.broadcast %7 : vector<1x30xf32> to vector<16x30xf32>
    %9 = vector.shape_cast %4 : vector<1x30xf32> to vector<1x30xf32>
    %10 = vector.broadcast %9 : vector<1x30xf32> to vector<16x30xf32>
    %11 = arith.select %6, %8, %10 : vector<16x30xi1>, vector<16x30xf32>
    %12 = vector.broadcast %0 : vector<16x1xf32> to vector<16x30xf32>
    %13 = arith.mulf %12, %11 : vector<16x30xf32>
    %cst_5 = arith.constant dense<0xFF800000> : vector<16xf32>
    %14 = vector.multi_reduction <maximumf>, %13, %cst_5 [1] : vector<16x30xf32> to vector<16xf32>
    %15 = vector.shape_cast %14 : vector<16xf32> to vector<16x1xf32>
    %16 = vector.broadcast %15 : vector<16x1xf32> to vector<16x30xf32>
    %17 = arith.subf %13, %16 : vector<16x30xf32>
    %18 = math.exp %17 : vector<16x30xf32>
    %cst_6 = arith.constant dense<0.000000e+00> : vector<16xf32>
    %19 = vector.multi_reduction <add>, %18, %cst_6 [1] : vector<16x30xf32> to vector<16xf32>
    %20 = vector.shape_cast %19 : vector<16xf32> to vector<16x1xf32>
    %21 = tpu.reciprocal %20 {approx = true} : vector<16x1xf32> -> vector<16x1xf32>
    %22 = vector.broadcast %21 : vector<16x1xf32> to vector<16x30xf32>
    %23 = arith.mulf %18, %22 : vector<16x30xf32>
    %c0_7 = arith.constant 0 : index
    %c0_8 = arith.constant 0 : index
    %24 = vector.load %arg4[%c0_7, %c0_8] : memref<30x100xf32, #tpu.memory_space<vmem>>, vector<30x100xf32>
    %cst_9 = arith.constant dense<0.000000e+00> : vector<16x100xf32>
    %25 = tpu.matmul %23, %24, %cst_9 {dimension_numbers = #tpu.dot_dimension_numbers<[1], [0], [0], [1], [0, 0, 1, 1], [], []>} : vector<16x30xf32>, vector<30x100xf32>, vector<16x100xf32> -> vector<16x100xf32>
    %c0_10 = arith.constant 0 : index
    %c0_11 = arith.constant 0 : index
    %26 = vector.load %arg5[%c0_10, %c0_11] : memref<16x100xf32, #tpu.memory_space<vmem>>, vector<16x100xf32>
    tpu.vector_store %arg5[%c0_10, %c0_11], %25 {strides = array<i32>} : memref<16x100xf32, #tpu.memory_space<vmem>>, vector<16x100xf32>,
    return
  }
  func.func @transform_0(%arg0: i32) -> (i32, i32) {
    %c0_i32 = arith.constant 0 : i32
    %c0_i32_0 = arith.constant 0 : i32
    return %arg0, %c0_i32 : i32, i32
  }
  func.func @transform_1(%arg0: i32) -> (i32, i32) {
    %c0_i32 = arith.constant 0 : i32
    %c0_i32_0 = arith.constant 0 : i32
    %c0_i32_1 = arith.constant 0 : i32
    return %c0_i32, %c0_i32_0 : i32, i32
  }
  func.func @transform_2(%arg0: i32) -> (i32, i32) {
    %c0_i32 = arith.constant 0 : i32
    %c0_i32_0 = arith.constant 0 : i32
    %c0_i32_1 = arith.constant 0 : i32
    return %c0_i32, %c0_i32_0 : i32, i32
  }
  func.func @transform_3(%arg0: i32) -> (i32, i32) {
    %c0_i32 = arith.constant 0 : i32
    %c0_i32_0 = arith.constant 0 : i32
    %c0_i32_1 = arith.constant 0 : i32
    return %c0_i32, %c0_i32_0 : i32, i32
  }
  func.func @transform_4(%arg0: i32) -> (i32, i32) {
    %c0_i32 = arith.constant 0 : i32
    %c0_i32_0 = arith.constant 0 : i32
    return %arg0, %c0_i32 : i32, i32
  }
}

</mosaic_0001>

<llo_original>
// kernel: tpu_custom_call.1
$region0: #{tpu_custom_call.1}
  #allocation0 [shape = 'u32[]', space=smem, size = 0x4, offset = 0x4, fixed_abs, tag = 'smem constant byte address 0x4 - core index']
  #allocation1 [shape = 'u32[144,128]{1,0:T(1,128)}', space=vmem, size = 0x12000, scoped, tag = 'internal scratch']
  %s0 = inlined_call_operand.vmem [shape: f32[16,1], index: 0, kind: input, shape index: {}]
  %s1 = inlined_call_operand.vmem [shape: f32[1,30], index: 1, kind: input, shape index: {}]
  %s2 = inlined_call_operand.vmem [shape: f32[1,30], index: 2, kind: input, shape index: {}]
  %s3 = inlined_call_operand.hbm [shape: f32[30,100], index: 3, kind: input, shape index: {}]
  %s4 = inlined_call_operand.hbm [shape: f32[16,100], index: 4, kind: output, shape index: {}]
  %s5 = sld [smem:[#allocation0]]
  $region30: #{tpu_custom_call.1} parent=0
    _
  %s7 = ssub.s32 1, %s5
  %s8 = scalar_select 0, %s7, %s5
  $region1: #{tpu_custom_call.1} parent=0
    #allocation2 [shape = 'u8[16384]{0}', space=vmem, size = 0x4000, scoped, tag = 'input window, operand 3, single buffered']
    #allocation3 [shape = 's32[1]{0}', space=sflag, size = 0x4, scoped, tag = 'scoped memory for tpu_custom_call.1']
    #allocation4 [shape = 's32[1]{0}', space=sflag, size = 0x4, scoped, tag = 'scoped memory for tpu_custom_call.1']
    #allocation5 [shape = 'u8[8192]{0}', space=vmem, size = 0x2000, scoped, tag = 'output window, operand 0, single buffered']
    %9 = vsyncpa [#allocation3], 0
    %10 = vsyncpa [#allocation4], 0
    // Predicated region
    $region2: #{tpu_custom_call.1} parent=1 // pred_check
      _
    $region3: #{tpu_custom_call.1} parent=1 // pred_check_branch
      %12 = sbr.rel (0) target = $region5
    $region4: #{tpu_custom_call.1} parent=1 // pred_region
      _
    $region5: #{tpu_custom_call.1} parent=1 // pred_fallthru
      _
    // Predicated region
    $region6: #{tpu_custom_call.1} parent=1 // pred_check
      _
    $region7: #{tpu_custom_call.1} parent=1 // pred_check_branch
      %14 = sbr.rel (0) target = $region9
    $region8: #{tpu_custom_call.1} parent=1 // pred_region
      _
    $region9: #{tpu_custom_call.1} parent=1 // pred_fallthru
      _
    // Predicated region
    $region10: #{tpu_custom_call.1} parent=1 // pred_check
      _
    $region11: #{tpu_custom_call.1} parent=1 // pred_check_branch
      %16 = sbr.rel (0) target = $region13
    $region12: #{tpu_custom_call.1} parent=1 // pred_region
      _
    $region13: #{tpu_custom_call.1} parent=1 // pred_fallthru
      _
    // Predicated region
    $region14: #{tpu_custom_call.1} parent=1 // pred_check
      _
    $region15: #{tpu_custom_call.1} parent=1 // pred_check_branch
      %18 = sbr.rel (0) target = $region17
    $region16: #{tpu_custom_call.1} parent=1 // pred_region
      %s20 = ssub.s32 512, 512
      %21 = vsyncadd [#allocation3], %s20
      %s22 = sshll.u32 [#allocation2], 4
      %s23 = int_to_ptr.vmem [resolvable:$true] %s22
      %28 = dma.hbm_to_vmem [thread:$0]  %s3, 512, %s23, [#allocation3], 128, 128, 8
    $region17: #{tpu_custom_call.1} parent=1 // pred_fallthru
      _
    // Predicated region
    $region18: #{tpu_custom_call.1} parent=1 // pred_check
      _
    $region19: #{tpu_custom_call.1} parent=1 // pred_check_branch
      %30 = sbr.rel (0) target = $region21
    $region20: #{tpu_custom_call.1} parent=1 // pred_region
      %31 = dma.done [#allocation3], 512
    $region21: #{tpu_custom_call.1} parent=1 // pred_fallthru
      _
    %v32 = vld [vmem:[%s0] sm:$0xff]
    %v33 = vld [vmem:[%s0 + $0x8] sm:$0xff]
    %vm34 = vcmp.ge.f32.partialorder %v32, 0.0
    %vm35 = vcmp.ge.f32.partialorder %v33, 0.0
    %v36 = vld [vmem:[%s1] sm:$0x1]
    %v37 = vld [vmem:[%s2] sm:$0x1]
    %v38 = vsel %vm34, 1, 0
    %v39 = vsel %vm35, 1, 0
    %40 = vset.pattern.permute.xlu0 0
    %41 = vperm.xlu0 %40, %v38
    %v42 = vpop.permute.xlu0 %41
    %43 = vset.pattern.permute.xlu0 0
    %44 = vperm.xlu0 %43, %v39
    %v45 = vpop.permute.xlu0 %44
    %vm46 = vcmp.eq.s32.totalorder %v42, 1
    %vm47 = vcmp.eq.s32.totalorder %v45, 1
    %v49 = vlaneseq
    %v50 = vshrl.u32 %v49, 7
    %v51 = vsub.s32 0, %v50
    %v52 = vrot.slane %v36, %v51
    %v55 = vlaneseq
    %v56 = vshrl.u32 %v55, 7
    %v57 = vsub.s32 0, %v56
    %v58 = vrot.slane %v37, %v57
    %v60 = vsel %vm46, %v52, %v58
    %v61 = vsel %vm47, %v52, %v58
    %63 = vset.pattern.permute.xlu0 0
    %64 = vperm.xlu0 %63, %v32
    %v65 = vpop.permute.xlu0 %64
    %68 = vset.pattern.permute.xlu0 0
    %69 = vperm.xlu0 %68, %v33
    %v70 = vpop.permute.xlu0 %69
    %v72 = vmul.f32 %v65, %v60
    %v73 = vmul.f32 %v70, %v61
    %vm74 = vcmask 244736
    %v75 = vsel %vm74, %v72, -inf
    %76 = vmax.xlane.f32.xlu0 %v75
    %v77 = vpop.xlane.xlu0 %76
    %v78 = vsel %vm74, %v73, -inf
    %79 = vmax.xlane.f32.xlu0 %v78
    %v80 = vpop.xlane.xlu0 %79
    %v81 = vsub.f32 %v72, %v77
    %v82 = vsub.f32 %v73, %v80
    %v83 = vmul.f32 %v81, 1.442695
    %v84 = vpow.pop %v83
    %v85 = vmul.f32 %v82, 1.442695
    %v86 = vpow.pop %v85
    %v87 = vsel %vm74, %v84, 0.0
    %88 = vadd.xlane.f32.xlu0 %v87
    %v89 = vpop.xlane.xlu0 %88
    %v90 = vsel %vm74, %v86, 0.0
    %91 = vadd.xlane.f32.xlu0 %v90
    %v92 = vpop.xlane.xlu0 %91
    %v93 = vrcp.pop %v89
    %v94 = vrcp.pop %v92
    %v95 = vmul.f32 %v84, %v93
    %v96 = vmul.f32 %v86, %v94
    %v97 = vld [vmem:[#allocation2] sm:$0xff]
    %v98 = vld [vmem:[#allocation2 + $0x8] sm:$0xff]
    %v99 = vld [vmem:[#allocation2 + $0x10] sm:$0xff]
    %v100 = vld [vmem:[#allocation2 + $0x18] sm:$0x3f]
    %v102 = vsel %vm74, %v95, 0
    %v105 = vsel %vm74, %v96, 0
    %vm107 = vcmask 1045504
    %v109 = vsel %vm107, %v100, 0
    %111 = vmatprep.subr.mxu0 0.0
    %112 = vmatpush1.msra.mxu0 %v97
    %113 = vmatprep.subr.mxu0 0.0
    %114 = vmatpush1.msra.mxu0 %v98
    %115 = vmatprep.subr.mxu0 0.0
    %116 = vmatpush1.msra.mxu0 %v99
    %117 = vmatprep.subr.mxu0 0.0
    %118 = vmatpush1.msra.mxu0 %v109
    %119 = vmatprep.subr.mxu0 0.0
    %120 = vmatpush1.msra.mxu0 0.0
    %121 = vmatprep.subr.mxu0 0.0
    %122 = vmatpush1.msra.mxu0 0.0
    %123 = vmatprep.subr.mxu0 0.0
    %124 = vmatpush1.msra.mxu0 0.0
    %125 = vmatprep.subr.mxu0 0.0
    %126 = vmatpush1.msra.mxu0 0.0
    %127 = vmatprep.subr.mxu0 0.0
    %128 = vmatpush1.msra.mxu0 0.0
    %129 = vmatprep.subr.mxu0 0.0
    %130 = vmatpush1.msra.mxu0 0.0
    %131 = vmatprep.subr.mxu0 0.0
    %132 = vmatpush1.msra.mxu0 0.0
    %133 = vmatprep.subr.mxu0 0.0
    %134 = vmatpush1.msra.mxu0 0.0
    %135 = vmatprep.subr.mxu0 0.0
    %136 = vmatpush1.msra.mxu0 0.0
    %137 = vmatprep.subr.mxu0 0.0
    %138 = vmatpush1.msra.mxu0 0.0
    %139 = vmatprep.subr.mxu0 0.0
    %140 = vmatpush1.msra.mxu0 0.0
    %141 = vmatprep.subr.mxu0 0.0
    %142 = vmatpush1.msra.mxu0 0.0
    %143 = vmatprep.subr.mxu0 0.0
    %144 = vmatpush1.msra.mxu0 0.0
    %145 = vmatprep.subr.mxu0 0.0
    %146 = vmatpush1.msra.mxu0 0.0
    %147 = vmatprep.subr.mxu0 0.0
    %148 = vmatpush1.msra.mxu0 0.0
    %149 = vmatprep.subr.mxu0 0.0
    %150 = vmatpush1.msra.mxu0 0.0
    %151 = vmatprep.subr.mxu0 0.0
    %152 = vmatpush1.msra.mxu0 0.0
    %153 = vmatprep.subr.mxu0 0.0
    %154 = vmatpush1.msra.mxu0 0.0
    %155 = vmatprep.subr.mxu0 0.0
    %156 = vmatpush1.msra.mxu0 0.0
    %157 = vmatprep.subr.mxu0 0.0
    %158 = vmatpush1.msra.mxu0 0.0
    %159 = vmatprep.subr.mxu0 0.0
    %160 = vmatpush1.msra.mxu0 0.0
    %161 = vmatprep.subr.mxu0 0.0
    %162 = vmatpush1.msra.mxu0 0.0
    %163 = vmatprep.subr.mxu0 0.0
    %164 = vmatpush1.msra.mxu0 0.0
    %165 = vmatprep.subr.mxu0 0.0
    %166 = vmatpush1.msra.mxu0 0.0
    %167 = vmatprep.subr.mxu0 0.0
    %168 = vmatpush1.msra.mxu0 0.0
    %169 = vmatprep.subr.mxu0 0.0
    %170 = vmatpush1.msra.mxu0 0.0
    %171 = vmatprep.subr.mxu0 0.0
    %172 = vmatpush1.msra.mxu0 0.0
    %173 = vmatprep.subr.mxu0 0.0
    %174 = vmatpush1.msra.mxu0 0.0
    %175 = vmatprep.mubr.f32.mxu0 0.0
    %176 = vmatmul.mubr.f32.gmra.mrb[0].mxu0 %v102
    %v177 = vpop.f32.mrb[0].mxu0
    %v178 = vadd.f32 0.0, %v177
    %v179 = vpop.f32.mrb[0].mxu0
    %180 = vmatprep.mubr.f32.mxu0 0.0
    %181 = vmatmul.mubr.f32.gmra.mrb[0].mxu0 %v105
    %v182 = vpop.f32.mrb[0].mxu0
    %v183 = vadd.f32 0.0, %v182
    %v184 = vpop.f32.mrb[0].mxu0
    %185 = vdwg.mxu0
    %vm186 = vcmask 818176
    %187 = vst.msk [vmem:[#allocation5] sm:$0xff] %vm186, %v178
    %188 = vst.msk [vmem:[#allocation5 + $0x8] sm:$0xff] %vm186, %v183
    // Predicated region
    $region22: #{tpu_custom_call.1} parent=1 // pred_check
      _
    $region23: #{tpu_custom_call.1} parent=1 // pred_check_branch
      %190 = sbr.rel (0) target = $region25
    $region24: #{tpu_custom_call.1} parent=1 // pred_region
      %s192 = ssub.s32 256, 256
      %193 = vsyncadd [#allocation4], %s192
      %s194 = sshll.u32 [#allocation5], 4
      %s195 = int_to_ptr.vmem [resolvable:$true] %s194
      %200 = dma.vmem_to_hbm [thread:$0]  %s195, 256, %s4, [#allocation4], 128, 128, 8
    $region25: #{tpu_custom_call.1} parent=1 // pred_fallthru
      _
    // Predicated region
    $region26: #{tpu_custom_call.1} parent=1 // pred_check
      _
    $region27: #{tpu_custom_call.1} parent=1 // pred_check_branch
      %202 = sbr.rel (0) target = $region29
    $region28: #{tpu_custom_call.1} parent=1 // pred_region
      %203 = dma.done [#allocation4], 256
    $region29: #{tpu_custom_call.1} parent=1 // pred_fallthru
      _
    %204 = vsyncpa [#allocation3], 1
    %205 = vsyncpa [#allocation4], 1

</llo_original>
